<compile_context>
chip_gen: v7x
topology: tpu7x:2x2x1
jax: 0.10.0
libtpu: 0.0.40
codegen_flags: <defaults>
</compile_context>

<pallas_src>
import jax
import jax.numpy as jnp
from jax.experimental import pallas as pl
from jax.experimental.pallas import tpu as pltpu


def _conv1x1_plus3_interior_kernel(x_ref, w_ref, b_ref, o_ref):
    # x_ref: (N, Cin, H*W)   f32, VMEM  (lane-dense last dim)
    # w_ref: (Cout*Cin,)     f32, SMEM  (flattened scalar weights)
    # b_ref: (Cout,)         f32, SMEM  (scalar biases)
    # o_ref: (N, Cout, H*W)  f32, VMEM
    n, cin, hw = x_ref.shape
    cout = o_ref.shape[1]

    # Hoist the Cin input-plane loads out of the Cout loop; reuse for all
    # output channels (3 full-plane loads total instead of 30).
    xs = [x_ref[:, c, :] for c in range(cin)]           # each (N, H*W)

    for co in range(cout):
        # 1x1 conv == per-pixel channel mix: Cin scalar*vector VPU FMAs.
        acc = xs[0] * w_ref[co * cin + 0]
        for c in range(1, cin):
            acc = acc + xs[c] * w_ref[co * cin + c]
        acc = acc + (b_ref[co] + jnp.float32(3.0))
        # One aligned, unmasked, lane-dense store per output plane.
        o_ref[:, co, :] = acc.astype(o_ref.dtype)


def conv1x1_pad1_plus3(x_nchw, weight, bias):
    """x_nchw: (N, Cin, H, W) f32; weight: (Cout, Cin, 1, 1); bias: (Cout,)."""
    n, cin, h, w = x_nchw.shape
    cout = weight.shape[0]
    ho, wo = h + 2, w + 2

    x_flat = x_nchw.reshape(n, cin, h * w)               # free, contiguous
    w_vec = weight.reshape(cout * cin).astype(jnp.float32)   # 1D SMEM scalars
    b_vec = bias.reshape(cout).astype(jnp.float32)

    interior = pl.pallas_call(
        _conv1x1_plus3_interior_kernel,
        out_shape=jax.ShapeDtypeStruct((n, cout, h * w), x_nchw.dtype),
        in_specs=[
            pl.BlockSpec(memory_space=pltpu.MemorySpace.VMEM),   # x planes
            pl.BlockSpec(memory_space=pltpu.MemorySpace.SMEM),   # weights
            pl.BlockSpec(memory_space=pltpu.MemorySpace.SMEM),   # biases
        ],
        out_specs=pl.BlockSpec(memory_space=pltpu.MemorySpace.VMEM),
    )(x_flat, w_vec, b_vec)

    interior = interior.reshape(n, cout, h, w)
    # padding=1: border pixels see only zero-padded input, so they equal
    # bias[co] + 3.  Compose the padded tensor in the wrapper (pure bandwidth).
    border = jnp.broadcast_to(
        (b_vec + jnp.float32(3.0))[None, :, None, None],
        (n, cout, ho, wo)).astype(x_nchw.dtype)
    return jax.lax.dynamic_update_slice(border, interior, (0, 0, 1, 1))


if __name__ == "__main__":
    key = jax.random.PRNGKey(0)
    kx, kw, kb = jax.random.split(key, 3)

    # Shapes from the original module spec: x1 = torch.randn(2, 3, 64, 64)
    N, CIN, H, W = 2, 3, 64, 64
    COUT = 10

    x = jax.random.normal(kx, (N, CIN, H, W), dtype=jnp.float32)
    weight = jax.random.normal(kw, (COUT, CIN, 1, 1), dtype=jnp.float32) * 0.1
    bias = jax.random.normal(kb, (COUT,), dtype=jnp.float32) * 0.1

    fn = jax.jit(conv1x1_pad1_plus3)
    out = fn(x, weight, bias)
    jax.block_until_ready(out)

    # Pure-JAX reference: zero-pad, 1x1 conv, + bias + 3
    x_pad = jnp.pad(x, ((0, 0), (0, 0), (1, 1), (1, 1)))
    ref = (jnp.einsum("nchw,oc->nohw", x_pad, weight.reshape(COUT, CIN))
           + bias[None, :, None, None] + 3.0)
    assert out.shape == (N, COUT, H + 2, W + 2)
    assert jnp.allclose(out, ref, atol=1e-4, rtol=1e-4)

    print("KERNEL_OK")
</pallas_src>

<mosaic_0001>
module attributes {stable_mosaic.version = 11 : i64} {
  func.func @_conv1x1_plus3_interior_kernel(%arg0: memref<2x3x4096xf32, #tpu.memory_space<vmem>>, %arg1: memref<30xf32, #tpu.memory_space<smem>>, %arg2: memref<10xf32, #tpu.memory_space<smem>>, %arg3: memref<2x10x4096xf32, #tpu.memory_space<vmem>>) attributes {dimension_semantics = [], scalar_prefetch = 0 : i64, scratch_operands = 0 : i64, tpu.core_type = #tpu.core_type<tc>} {
    %c0 = arith.constant 0 : index
    %c0_0 = arith.constant 0 : index
    %c0_1 = arith.constant 0 : index
    %0 = vector.load %arg0[%c0, %c0_0, %c0_1] : memref<2x3x4096xf32, #tpu.memory_space<vmem>>, vector<2x1x4096xf32>
    %1 = vector.shape_cast %0 : vector<2x1x4096xf32> to vector<2x4096xf32>
    %c0_2 = arith.constant 0 : index
    %c1 = arith.constant 1 : index
    %c0_3 = arith.constant 0 : index
    %2 = vector.load %arg0[%c0_2, %c1, %c0_3] : memref<2x3x4096xf32, #tpu.memory_space<vmem>>, vector<2x1x4096xf32>
    %3 = vector.shape_cast %2 : vector<2x1x4096xf32> to vector<2x4096xf32>
    %c0_4 = arith.constant 0 : index
    %c2 = arith.constant 2 : index
    %c0_5 = arith.constant 0 : index
    %4 = vector.load %arg0[%c0_4, %c2, %c0_5] : memref<2x3x4096xf32, #tpu.memory_space<vmem>>, vector<2x1x4096xf32>
    %5 = vector.shape_cast %4 : vector<2x1x4096xf32> to vector<2x4096xf32>
    %c0_6 = arith.constant 0 : index
    %6 = memref.load %arg1[%c0_6] : memref<30xf32, #tpu.memory_space<smem>>
    %7 = vector.broadcast %6 : f32 to vector<2x4096xf32>
    %8 = arith.mulf %1, %7 : vector<2x4096xf32>
    %c1_7 = arith.constant 1 : index
    %9 = memref.load %arg1[%c1_7] : memref<30xf32, #tpu.memory_space<smem>>
    %10 = vector.broadcast %9 : f32 to vector<2x4096xf32>
    %11 = arith.mulf %3, %10 : vector<2x4096xf32>
    %12 = arith.addf %8, %11 : vector<2x4096xf32>
    %c2_8 = arith.constant 2 : index
    %13 = memref.load %arg1[%c2_8] : memref<30xf32, #tpu.memory_space<smem>>
    %14 = vector.broadcast %13 : f32 to vector<2x4096xf32>
    %15 = arith.mulf %5, %14 : vector<2x4096xf32>
    %16 = arith.addf %12, %15 : vector<2x4096xf32>
    %c0_9 = arith.constant 0 : index
    %17 = memref.load %arg2[%c0_9] : memref<10xf32, #tpu.memory_space<smem>>
    %cst = arith.constant 3.000000e+00 : f32
    %18 = arith.addf %17, %cst : f32
    %19 = vector.broadcast %18 : f32 to vector<2x4096xf32>
    %20 = arith.addf %16, %19 : vector<2x4096xf32>
    %c0_10 = arith.constant 0 : index
    %c0_11 = arith.constant 0 : index
    %c0_12 = arith.constant 0 : index
    %21 = vector.load %arg3[%c0_10, %c0_11, %c0_12] : memref<2x10x4096xf32, #tpu.memory_space<vmem>>, vector<2x1x4096xf32>
    %22 = vector.shape_cast %21 : vector<2x1x4096xf32> to vector<2x4096xf32>
    %23 = vector.shape_cast %20 : vector<2x4096xf32> to vector<2x1x4096xf32>
    tpu.vector_store %arg3[%c0_10, %c0_11, %c0_12], %23 {strides = array<i32>} : memref<2x10x4096xf32, #tpu.memory_space<vmem>>, vector<2x1x4096xf32>,
    %c3 = arith.constant 3 : index
    %24 = memref.load %arg1[%c3] : memref<30xf32, #tpu.memory_space<smem>>
    %25 = vector.broadcast %24 : f32 to vector<2x4096xf32>
    %26 = arith.mulf %1, %25 : vector<2x4096xf32>
    %c4 = arith.constant 4 : index
    %27 = memref.load %arg1[%c4] : memref<30xf32, #tpu.memory_space<smem>>
    %28 = vector.broadcast %27 : f32 to vector<2x4096xf32>
    %29 = arith.mulf %3, %28 : vector<2x4096xf32>
    %30 = arith.addf %26, %29 : vector<2x4096xf32>
    %c5 = arith.constant 5 : index
    %31 = memref.load %arg1[%c5] : memref<30xf32, #tpu.memory_space<smem>>
    %32 = vector.broadcast %31 : f32 to vector<2x4096xf32>
    %33 = arith.mulf %5, %32 : vector<2x4096xf32>
    %34 = arith.addf %30, %33 : vector<2x4096xf32>
    %c1_13 = arith.constant 1 : index
    %35 = memref.load %arg2[%c1_13] : memref<10xf32, #tpu.memory_space<smem>>
    %cst_14 = arith.constant 3.000000e+00 : f32
    %36 = arith.addf %35, %cst_14 : f32
    %37 = vector.broadcast %36 : f32 to vector<2x4096xf32>
    %38 = arith.addf %34, %37 : vector<2x4096xf32>
    %c0_15 = arith.constant 0 : index
    %c1_16 = arith.constant 1 : index
    %c0_17 = arith.constant 0 : index
    %39 = vector.load %arg3[%c0_15, %c1_16, %c0_17] : memref<2x10x4096xf32, #tpu.memory_space<vmem>>, vector<2x1x4096xf32>
    %40 = vector.shape_cast %39 : vector<2x1x4096xf32> to vector<2x4096xf32>
    %41 = vector.shape_cast %38 : vector<2x4096xf32> to vector<2x1x4096xf32>
    tpu.vector_store %arg3[%c0_15, %c1_16, %c0_17], %41 {strides = array<i32>} : memref<2x10x4096xf32, #tpu.memory_space<vmem>>, vector<2x1x4096xf32>,
    %c6 = arith.constant 6 : index
    %42 = memref.load %arg1[%c6] : memref<30xf32, #tpu.memory_space<smem>>
    %43 = vector.broadcast %42 : f32 to vector<2x4096xf32>
    %44 = arith.mulf %1, %43 : vector<2x4096xf32>
    %c7 = arith.constant 7 : index
    %45 = memref.load %arg1[%c7] : memref<30xf32, #tpu.memory_space<smem>>
    %46 = vector.broadcast %45 : f32 to vector<2x4096xf32>
    %47 = arith.mulf %3, %46 : vector<2x4096xf32>
    %48 = arith.addf %44, %47 : vector<2x4096xf32>
    %c8 = arith.constant 8 : index
    %49 = memref.load %arg1[%c8] : memref<30xf32, #tpu.memory_space<smem>>
    %50 = vector.broadcast %49 : f32 to vector<2x4096xf32>
    %51 = arith.mulf %5, %50 : vector<2x4096xf32>
    %52 = arith.addf %48, %51 : vector<2x4096xf32>
    %c2_18 = arith.constant 2 : index
    %53 = memref.load %arg2[%c2_18] : memref<10xf32, #tpu.memory_space<smem>>
    %cst_19 = arith.constant 3.000000e+00 : f32
    %54 = arith.addf %53, %cst_19 : f32
    %55 = vector.broadcast %54 : f32 to vector<2x4096xf32>
    %56 = arith.addf %52, %55 : vector<2x4096xf32>
    %c0_20 = arith.constant 0 : index
    %c2_21 = arith.constant 2 : index
    %c0_22 = arith.constant 0 : index
    %57 = vector.load %arg3[%c0_20, %c2_21, %c0_22] : memref<2x10x4096xf32, #tpu.memory_space<vmem>>, vector<2x1x4096xf32>
    %58 = vector.shape_cast %57 : vector<2x1x4096xf32> to vector<2x4096xf32>
    %59 = vector.shape_cast %56 : vector<2x4096xf32> to vector<2x1x4096xf32>
    tpu.vector_store %arg3[%c0_20, %c2_21, %c0_22], %59 {strides = array<i32>} : memref<2x10x4096xf32, #tpu.memory_space<vmem>>, vector<2x1x4096xf32>,
    %c9 = arith.constant 9 : index
    %60 = memref.load %arg1[%c9] : memref<30xf32, #tpu.memory_space<smem>>
    %61 = vector.broadcast %60 : f32 to vector<2x4096xf32>
    %62 = arith.mulf %1, %61 : vector<2x4096xf32>
    %c10 = arith.constant 10 : index
    %63 = memref.load %arg1[%c10] : memref<30xf32, #tpu.memory_space<smem>>
    %64 = vector.broadcast %63 : f32 to vector<2x4096xf32>
    %65 = arith.mulf %3, %64 : vector<2x4096xf32>
    %66 = arith.addf %62, %65 : vector<2x4096xf32>
    %c11 = arith.constant 11 : index
    %67 = memref.load %arg1[%c11] : memref<30xf32, #tpu.memory_space<smem>>
    %68 = vector.broadcast %67 : f32 to vector<2x4096xf32>
    %69 = arith.mulf %5, %68 : vector<2x4096xf32>
    %70 = arith.addf %66, %69 : vector<2x4096xf32>
    %c3_23 = arith.constant 3 : index
    %71 = memref.load %arg2[%c3_23] : memref<10xf32, #tpu.memory_space<smem>>
    %cst_24 = arith.constant 3.000000e+00 : f32
    %72 = arith.addf %71, %cst_24 : f32
    %73 = vector.broadcast %72 : f32 to vector<2x4096xf32>
    %74 = arith.addf %70, %73 : vector<2x4096xf32>
    %c0_25 = arith.constant 0 : index
    %c3_26 = arith.constant 3 : index
    %c0_27 = arith.constant 0 : index
    %75 = vector.load %arg3[%c0_25, %c3_26, %c0_27] : memref<2x10x4096xf32, #tpu.memory_space<vmem>>, vector<2x1x4096xf32>
    %76 = vector.shape_cast %75 : vector<2x1x4096xf32> to vector<2x4096xf32>
    %77 = vector.shape_cast %74 : vector<2x4096xf32> to vector<2x1x4096xf32>
    tpu.vector_store %arg3[%c0_25, %c3_26, %c0_27], %77 {strides = array<i32>} : memref<2x10x4096xf32, #tpu.memory_space<vmem>>, vector<2x1x4096xf32>,
    %c12 = arith.constant 12 : index
    %78 = memref.load %arg1[%c12] : memref<30xf32, #tpu.memory_space<smem>>
    %79 = vector.broadcast %78 : f32 to vector<2x4096xf32>
    %80 = arith.mulf %1, %79 : vector<2x4096xf32>
    %c13 = arith.constant 13 : index
    %81 = memref.load %arg1[%c13] : memref<30xf32, #tpu.memory_space<smem>>
    %82 = vector.broadcast %81 : f32 to vector<2x4096xf32>
    %83 = arith.mulf %3, %82 : vector<2x4096xf32>
    %84 = arith.addf %80, %83 : vector<2x4096xf32>
    %c14 = arith.constant 14 : index
    %85 = memref.load %arg1[%c14] : memref<30xf32, #tpu.memory_space<smem>>
    %86 = vector.broadcast %85 : f32 to vector<2x4096xf32>
    %87 = arith.mulf %5, %86 : vector<2x4096xf32>
    %88 = arith.addf %84, %87 : vector<2x4096xf32>
    %c4_28 = arith.constant 4 : index
    %89 = memref.load %arg2[%c4_28] : memref<10xf32, #tpu.memory_space<smem>>
    %cst_29 = arith.constant 3.000000e+00 : f32
    %90 = arith.addf %89, %cst_29 : f32
    %91 = vector.broadcast %90 : f32 to vector<2x4096xf32>
    %92 = arith.addf %88, %91 : vector<2x4096xf32>
    %c0_30 = arith.constant 0 : index
    %c4_31 = arith.constant 4 : index
    %c0_32 = arith.constant 0 : index
    %93 = vector.load %arg3[%c0_30, %c4_31, %c0_32] : memref<2x10x4096xf32, #tpu.memory_space<vmem>>, vector<2x1x4096xf32>
    %94 = vector.shape_cast %93 : vector<2x1x4096xf32> to vector<2x4096xf32>
    %95 = vector.shape_cast %92 : vector<2x4096xf32> to vector<2x1x4096xf32>
    tpu.vector_store %arg3[%c0_30, %c4_31, %c0_32], %95 {strides = array<i32>} : memref<2x10x4096xf32, #tpu.memory_space<vmem>>, vector<2x1x4096xf32>,
    %c15 = arith.constant 15 : index
    %96 = memref.load %arg1[%c15] : memref<30xf32, #tpu.memory_space<smem>>
    %97 = vector.broadcast %96 : f32 to vector<2x4096xf32>
    %98 = arith.mulf %1, %97 : vector<2x4096xf32>
    %c16 = arith.constant 16 : index
    %99 = memref.load %arg1[%c16] : memref<30xf32, #tpu.memory_space<smem>>
    %100 = vector.broadcast %99 : f32 to vector<2x4096xf32>
    %101 = arith.mulf %3, %100 : vector<2x4096xf32>
    %102 = arith.addf %98, %101 : vector<2x4096xf32>
    %c17 = arith.constant 17 : index
    %103 = memref.load %arg1[%c17] : memref<30xf32, #tpu.memory_space<smem>>
    %104 = vector.broadcast %103 : f32 to vector<2x4096xf32>
    %105 = arith.mulf %5, %104 : vector<2x4096xf32>
    %106 = arith.addf %102, %105 : vector<2x4096xf32>
    %c5_33 = arith.constant 5 : index
    %107 = memref.load %arg2[%c5_33] : memref<10xf32, #tpu.memory_space<smem>>
    %cst_34 = arith.constant 3.000000e+00 : f32
    %108 = arith.addf %107, %cst_34 : f32
    %109 = vector.broadcast %108 : f32 to vector<2x4096xf32>
    %110 = arith.addf %106, %109 : vector<2x4096xf32>
    %c0_35 = arith.constant 0 : index
    %c5_36 = arith.constant 5 : index
    %c0_37 = arith.constant 0 : index
    %111 = vector.load %arg3[%c0_35, %c5_36, %c0_37] : memref<2x10x4096xf32, #tpu.memory_space<vmem>>, vector<2x1x4096xf32>
    %112 = vector.shape_cast %111 : vector<2x1x4096xf32> to vector<2x4096xf32>
    %113 = vector.shape_cast %110 : vector<2x4096xf32> to vector<2x1x4096xf32>
    tpu.vector_store %arg3[%c0_35, %c5_36, %c0_37], %113 {strides = array<i32>} : memref<2x10x4096xf32, #tpu.memory_space<vmem>>, vector<2x1x4096xf32>,
    %c18 = arith.constant 18 : index
    %114 = memref.load %arg1[%c18] : memref<30xf32, #tpu.memory_space<smem>>
    %115 = vector.broadcast %114 : f32 to vector<2x4096xf32>
    %116 = arith.mulf %1, %115 : vector<2x4096xf32>
    %c19 = arith.constant 19 : index
    %117 = memref.load %arg1[%c19] : memref<30xf32, #tpu.memory_space<smem>>
    %118 = vector.broadcast %117 : f32 to vector<2x4096xf32>
    %119 = arith.mulf %3, %118 : vector<2x4096xf32>
    %120 = arith.addf %116, %119 : vector<2x4096xf32>
    %c20 = arith.constant 20 : index
    %121 = memref.load %arg1[%c20] : memref<30xf32, #tpu.memory_space<smem>>
    %122 = vector.broadcast %121 : f32 to vector<2x4096xf32>
    %123 = arith.mulf %5, %122 : vector<2x4096xf32>
    %124 = arith.addf %120, %123 : vector<2x4096xf32>
    %c6_38 = arith.constant 6 : index
    %125 = memref.load %arg2[%c6_38] : memref<10xf32, #tpu.memory_space<smem>>
    %cst_39 = arith.constant 3.000000e+00 : f32
    %126 = arith.addf %125, %cst_39 : f32
    %127 = vector.broadcast %126 : f32 to vector<2x4096xf32>
    %128 = arith.addf %124, %127 : vector<2x4096xf32>
    %c0_40 = arith.constant 0 : index
    %c6_41 = arith.constant 6 : index
    %c0_42 = arith.constant 0 : index
    %129 = vector.load %arg3[%c0_40, %c6_41, %c0_42] : memref<2x10x4096xf32, #tpu.memory_space<vmem>>, vector<2x1x4096xf32>
    %130 = vector.shape_cast %129 : vector<2x1x4096xf32> to vector<2x4096xf32>
    %131 = vector.shape_cast %128 : vector<2x4096xf32> to vector<2x1x4096xf32>
    tpu.vector_store %arg3[%c0_40, %c6_41, %c0_42], %131 {strides = array<i32>} : memref<2x10x4096xf32, #tpu.memory_space<vmem>>, vector<2x1x4096xf32>,
    %c21 = arith.constant 21 : index
    %132 = memref.load %arg1[%c21] : memref<30xf32, #tpu.memory_space<smem>>
    %133 = vector.broadcast %132 : f32 to vector<2x4096xf32>
    %134 = arith.mulf %1, %133 : vector<2x4096xf32>
    %c22 = arith.constant 22 : index
    %135 = memref.load %arg1[%c22] : memref<30xf32, #tpu.memory_space<smem>>
    %136 = vector.broadcast %135 : f32 to vector<2x4096xf32>
    %137 = arith.mulf %3, %136 : vector<2x4096xf32>
    %138 = arith.addf %134, %137 : vector<2x4096xf32>
    %c23 = arith.constant 23 : index
    %139 = memref.load %arg1[%c23] : memref<30xf32, #tpu.memory_space<smem>>
    %140 = vector.broadcast %139 : f32 to vector<2x4096xf32>
    %141 = arith.mulf %5, %140 : vector<2x4096xf32>
    %142 = arith.addf %138, %141 : vector<2x4096xf32>
    %c7_43 = arith.constant 7 : index
    %143 = memref.load %arg2[%c7_43] : memref<10xf32, #tpu.memory_space<smem>>
    %cst_44 = arith.constant 3.000000e+00 : f32
    %144 = arith.addf %143, %cst_44 : f32
    %145 = vector.broadcast %144 : f32 to vector<2x4096xf32>
    %146 = arith.addf %142, %145 : vector<2x4096xf32>
    %c0_45 = arith.constant 0 : index
    %c7_46 = arith.constant 7 : index
    %c0_47 = arith.constant 0 : index
    %147 = vector.load %arg3[%c0_45, %c7_46, %c0_47] : memref<2x10x4096xf32, #tpu.memory_space<vmem>>, vector<2x1x4096xf32>
    %148 = vector.shape_cast %147 : vector<2x1x4096xf32> to vector<2x4096xf32>
    %149 = vector.shape_cast %146 : vector<2x4096xf32> to vector<2x1x4096xf32>
    tpu.vector_store %arg3[%c0_45, %c7_46, %c0_47], %149 {strides = array<i32>} : memref<2x10x4096xf32, #tpu.memory_space<vmem>>, vector<2x1x4096xf32>,
    %c24 = arith.constant 24 : index
    %150 = memref.load %arg1[%c24] : memref<30xf32, #tpu.memory_space<smem>>
    %151 = vector.broadcast %150 : f32 to vector<2x4096xf32>
    %152 = arith.mulf %1, %151 : vector<2x4096xf32>
    %c25 = arith.constant 25 : index
    %153 = memref.load %arg1[%c25] : memref<30xf32, #tpu.memory_space<smem>>
    %154 = vector.broadcast %153 : f32 to vector<2x4096xf32>
    %155 = arith.mulf %3, %154 : vector<2x4096xf32>
    %156 = arith.addf %152, %155 : vector<2x4096xf32>
    %c26 = arith.constant 26 : index
    %157 = memref.load %arg1[%c26] : memref<30xf32, #tpu.memory_space<smem>>
    %158 = vector.broadcast %157 : f32 to vector<2x4096xf32>
    %159 = arith.mulf %5, %158 : vector<2x4096xf32>
    %160 = arith.addf %156, %159 : vector<2x4096xf32>
    %c8_48 = arith.constant 8 : index
    %161 = memref.load %arg2[%c8_48] : memref<10xf32, #tpu.memory_space<smem>>
    %cst_49 = arith.constant 3.000000e+00 : f32
    %162 = arith.addf %161, %cst_49 : f32
    %163 = vector.broadcast %162 : f32 to vector<2x4096xf32>
    %164 = arith.addf %160, %163 : vector<2x4096xf32>
    %c0_50 = arith.constant 0 : index
    %c8_51 = arith.constant 8 : index
    %c0_52 = arith.constant 0 : index
    %165 = vector.load %arg3[%c0_50, %c8_51, %c0_52] : memref<2x10x4096xf32, #tpu.memory_space<vmem>>, vector<2x1x4096xf32>
    %166 = vector.shape_cast %165 : vector<2x1x4096xf32> to vector<2x4096xf32>
    %167 = vector.shape_cast %164 : vector<2x4096xf32> to vector<2x1x4096xf32>
    tpu.vector_store %arg3[%c0_50, %c8_51, %c0_52], %167 {strides = array<i32>} : memref<2x10x4096xf32, #tpu.memory_space<vmem>>, vector<2x1x4096xf32>,
    %c27 = arith.constant 27 : index
    %168 = memref.load %arg1[%c27] : memref<30xf32, #tpu.memory_space<smem>>
    %169 = vector.broadcast %168 : f32 to vector<2x4096xf32>
    %170 = arith.mulf %1, %169 : vector<2x4096xf32>
    %c28 = arith.constant 28 : index
    %171 = memref.load %arg1[%c28] : memref<30xf32, #tpu.memory_space<smem>>
    %172 = vector.broadcast %171 : f32 to vector<2x4096xf32>
    %173 = arith.mulf %3, %172 : vector<2x4096xf32>
    %174 = arith.addf %170, %173 : vector<2x4096xf32>
    %c29 = arith.constant 29 : index
    %175 = memref.load %arg1[%c29] : memref<30xf32, #tpu.memory_space<smem>>
    %176 = vector.broadcast %175 : f32 to vector<2x4096xf32>
    %177 = arith.mulf %5, %176 : vector<2x4096xf32>
    %178 = arith.addf %174, %177 : vector<2x4096xf32>
    %c9_53 = arith.constant 9 : index
    %179 = memref.load %arg2[%c9_53] : memref<10xf32, #tpu.memory_space<smem>>
    %cst_54 = arith.constant 3.000000e+00 : f32
    %180 = arith.addf %179, %cst_54 : f32
    %181 = vector.broadcast %180 : f32 to vector<2x4096xf32>
    %182 = arith.addf %178, %181 : vector<2x4096xf32>
    %c0_55 = arith.constant 0 : index
    %c9_56 = arith.constant 9 : index
    %c0_57 = arith.constant 0 : index
    %183 = vector.load %arg3[%c0_55, %c9_56, %c0_57] : memref<2x10x4096xf32, #tpu.memory_space<vmem>>, vector<2x1x4096xf32>
    %184 = vector.shape_cast %183 : vector<2x1x4096xf32> to vector<2x4096xf32>
    %185 = vector.shape_cast %182 : vector<2x4096xf32> to vector<2x1x4096xf32>
    tpu.vector_store %arg3[%c0_55, %c9_56, %c0_57], %185 {strides = array<i32>} : memref<2x10x4096xf32, #tpu.memory_space<vmem>>, vector<2x1x4096xf32>,
    return
  }
}

</mosaic_0001>

<llo_original>
// kernel: conv1x1_pad1_plus3.1
$region0: #{conv1x1_pad1_plus3.1}
  #allocation0 [shape = 'u32[]', space=smem, size = 0x4, offset = 0x4, fixed_abs, tag = 'smem constant byte address 0x4 - core index']
  #allocation1 [shape = 'u32[144,128]{1,0:T(1,128)}', space=vmem, size = 0x12000, scoped, tag = 'internal scratch']
  %s0 = inlined_call_operand.vmem [shape: f32[2,3,4096], index: 0, kind: input, shape index: {}]
  %s1 = inlined_call_operand.vmem [shape: f32[30], index: 1, kind: input, shape index: {}]
  %s2 = inlined_call_operand.vmem [shape: f32[10], index: 2, kind: input, shape index: {}]
  %s3 = inlined_call_operand.vmem [shape: f32[2,10,4096], index: 3, kind: output, shape index: {}]
  %s4 = sld [smem:[#allocation0]]
  $region30: #{conv1x1_pad1_plus3.1} parent=0
    _
  %s6 = ssub.s32 1, %s4
  %s7 = scalar_select 0, %s6, %s4
  $region1: #{conv1x1_pad1_plus3.1} parent=0
    #allocation2 [shape = 'u8[512]{0}', space=smem, size = 0x200, scoped, tag = 'input window, operand 1, single buffered']
    #allocation3 [shape = 's32[1]{0}', space=sflag, size = 0x4, scoped, tag = 'scoped memory for conv1x1_pad1_plus3.1']
    #allocation4 [shape = 'u8[512]{0}', space=smem, size = 0x200, scoped, tag = 'input window, operand 2, single buffered']
    #allocation5 [shape = 's32[1]{0}', space=sflag, size = 0x4, scoped, tag = 'scoped memory for conv1x1_pad1_plus3.1']
    %8 = vsyncpa [#allocation3], 0
    %9 = vsyncpa [#allocation5], 0
    // Predicated region
    $region2: #{conv1x1_pad1_plus3.1} parent=1 // pred_check
      _
    $region3: #{conv1x1_pad1_plus3.1} parent=1 // pred_check_branch
      %11 = sbr.rel (0) target = $region5
    $region4: #{conv1x1_pad1_plus3.1} parent=1 // pred_region
      _
    $region5: #{conv1x1_pad1_plus3.1} parent=1 // pred_fallthru
      _
    // Predicated region
    $region6: #{conv1x1_pad1_plus3.1} parent=1 // pred_check
      _
    $region7: #{conv1x1_pad1_plus3.1} parent=1 // pred_check_branch
      %13 = sbr.rel (0) target = $region9
    $region8: #{conv1x1_pad1_plus3.1} parent=1 // pred_region
      %s15 = ssub.s32 16, 16
      %16 = vsyncadd [#allocation3], %s15
      %s18 = sshll.u32 %s1, 4
      %s19 = int_to_ptr.vmem [resolvable:$true] %s18
      %21 = dma.vmem_to_smem %s19, 16, [#allocation2], [#allocation3]
    $region9: #{conv1x1_pad1_plus3.1} parent=1 // pred_fallthru
      _
    // Predicated region
    $region10: #{conv1x1_pad1_plus3.1} parent=1 // pred_check
      _
    $region11: #{conv1x1_pad1_plus3.1} parent=1 // pred_check_branch
      %23 = sbr.rel (0) target = $region13
    $region12: #{conv1x1_pad1_plus3.1} parent=1 // pred_region
      %s25 = ssub.s32 16, 16
      %26 = vsyncadd [#allocation5], %s25
      %s28 = sshll.u32 %s2, 4
      %s29 = int_to_ptr.vmem [resolvable:$true] %s28
      %31 = dma.vmem_to_smem %s29, 16, [#allocation4], [#allocation5]
    $region13: #{conv1x1_pad1_plus3.1} parent=1 // pred_fallthru
      _
    // Predicated region
    $region14: #{conv1x1_pad1_plus3.1} parent=1 // pred_check
      _
    $region15: #{conv1x1_pad1_plus3.1} parent=1 // pred_check_branch
      %33 = sbr.rel (0) target = $region17
    $region16: #{conv1x1_pad1_plus3.1} parent=1 // pred_region
      %34 = dma.done [#allocation3], 16
    $region17: #{conv1x1_pad1_plus3.1} parent=1 // pred_fallthru
      _
    // Predicated region
    $region18: #{conv1x1_pad1_plus3.1} parent=1 // pred_check
      _
    $region19: #{conv1x1_pad1_plus3.1} parent=1 // pred_check_branch
      %36 = sbr.rel (0) target = $region21
    $region20: #{conv1x1_pad1_plus3.1} parent=1 // pred_region
      %37 = dma.done [#allocation5], 16
    $region21: #{conv1x1_pad1_plus3.1} parent=1 // pred_fallthru
      _
    %38 = sfence
    %v39 = vld [vmem:[%s0] ss:$4 sm:$0xff]
    %s40 = scalar_lea.vmem %s0, 32
    %v41 = vld [vmem:[%s40] ss:$4 sm:$0xff]
    %s42 = scalar_lea.vmem %s0, 64
    %v43 = vld [vmem:[%s42] ss:$4 sm:$0xff]
    %s44 = scalar_lea.vmem %s0, 96
    %v45 = vld [vmem:[%s44] ss:$4 sm:$0xff]
    %s46 = scalar_lea.vmem %s0, 128
    %v47 = vld [vmem:[%s46] ss:$4 sm:$0xff]
    %s48 = scalar_lea.vmem %s0, 160
    %v49 = vld [vmem:[%s48] ss:$4 sm:$0xff]
    %s50 = scalar_lea.vmem %s0, 192
    %v51 = vld [vmem:[%s50] ss:$4 sm:$0xff]
    %s52 = scalar_lea.vmem %s0, 224
    %v53 = vld [vmem:[%s52] ss:$4 sm:$0xff]
    %s54 = scalar_lea.vmem %s0, 1
    %v55 = vld [vmem:[%s54] ss:$4 sm:$0xff]
    %s56 = scalar_lea.vmem %s0, 33
    %v57 = vld [vmem:[%s56] ss:$4 sm:$0xff]
    %s58 = scalar_lea.vmem %s0, 65
    %v59 = vld [vmem:[%s58] ss:$4 sm:$0xff]
    %s60 = scalar_lea.vmem %s0, 97
    %v61 = vld [vmem:[%s60] ss:$4 sm:$0xff]
    %s62 = scalar_lea.vmem %s0, 129
    %v63 = vld [vmem:[%s62] ss:$4 sm:$0xff]
    %s64 = scalar_lea.vmem %s0, 161
    %v65 = vld [vmem:[%s64] ss:$4 sm:$0xff]
    %s66 = scalar_lea.vmem %s0, 193
    %v67 = vld [vmem:[%s66] ss:$4 sm:$0xff]
    %s68 = scalar_lea.vmem %s0, 225
    %v69 = vld [vmem:[%s68] ss:$4 sm:$0xff]
    %s70 = scalar_lea.vmem %s0, 2
    %v71 = vld [vmem:[%s70] ss:$4 sm:$0xff]
    %s72 = scalar_lea.vmem %s0, 34
    %v73 = vld [vmem:[%s72] ss:$4 sm:$0xff]
    %s74 = scalar_lea.vmem %s0, 66
    %v75 = vld [vmem:[%s74] ss:$4 sm:$0xff]
    %s76 = scalar_lea.vmem %s0, 98
    %v77 = vld [vmem:[%s76] ss:$4 sm:$0xff]
    %s78 = scalar_lea.vmem %s0, 130
    %v79 = vld [vmem:[%s78] ss:$4 sm:$0xff]
    %s80 = scalar_lea.vmem %s0, 162
    %v81 = vld [vmem:[%s80] ss:$4 sm:$0xff]
    %s82 = scalar_lea.vmem %s0, 194
    %v83 = vld [vmem:[%s82] ss:$4 sm:$0xff]
    %s84 = scalar_lea.vmem %s0, 226
    %v85 = vld [vmem:[%s84] ss:$4 sm:$0xff]
    %s86 = sld [smem:[#allocation2]]
    %v87 = vstv %s86
    %v88 = vmul.f32 %v39, %v87
    %v89 = vmul.f32 %v41, %v87
    %v90 = vmul.f32 %v43, %v87
    %v91 = vmul.f32 %v45, %v87
    %v92 = vmul.f32 %v47, %v87
    %v93 = vmul.f32 %v49, %v87
    %v94 = vmul.f32 %v51, %v87
    %v95 = vmul.f32 %v53, %v87
    %s96 = sld [smem:[#allocation2 + $0x1]]
    %v97 = vstv %s96
    %v98 = vmul.f32 %v55, %v97
    %v99 = vmul.f32 %v57, %v97
    %v100 = vmul.f32 %v59, %v97
    %v101 = vmul.f32 %v61, %v97
    %v102 = vmul.f32 %v63, %v97
    %v103 = vmul.f32 %v65, %v97
    %v104 = vmul.f32 %v67, %v97
    %v105 = vmul.f32 %v69, %v97
    %v106 = vadd.f32 %v88, %v98
    %v107 = vadd.f32 %v89, %v99
    %v108 = vadd.f32 %v90, %v100
    %v109 = vadd.f32 %v91, %v101
    %v110 = vadd.f32 %v92, %v102
    %v111 = vadd.f32 %v93, %v103
    %v112 = vadd.f32 %v94, %v104
    %v113 = vadd.f32 %v95, %v105
    %s114 = sld [smem:[#allocation2 + $0x2]]
    %v115 = vstv %s114
    %v116 = vmul.f32 %v71, %v115
    %v117 = vmul.f32 %v73, %v115
    %v118 = vmul.f32 %v75, %v115
    %v119 = vmul.f32 %v77, %v115
    %v120 = vmul.f32 %v79, %v115
    %v121 = vmul.f32 %v81, %v115
    %v122 = vmul.f32 %v83, %v115
    %v123 = vmul.f32 %v85, %v115
    %v124 = vadd.f32 %v106, %v116
    %v125 = vadd.f32 %v107, %v117
    %v126 = vadd.f32 %v108, %v118
    %v127 = vadd.f32 %v109, %v119
    %v128 = vadd.f32 %v110, %v120
    %v129 = vadd.f32 %v111, %v121
    %v130 = vadd.f32 %v112, %v122
    %v131 = vadd.f32 %v113, %v123
    %s132 = sld [smem:[#allocation4]]
    %s133 = sadd.f32 %s132, 3.0
    %v134 = vstv %s133
    %v135 = vadd.f32 %v124, %v134
    %v136 = vadd.f32 %v125, %v134
    %v137 = vadd.f32 %v126, %v134
    %v138 = vadd.f32 %v127, %v134
    %v139 = vadd.f32 %v128, %v134
    %v140 = vadd.f32 %v129, %v134
    %v141 = vadd.f32 %v130, %v134
    %v142 = vadd.f32 %v131, %v134
    %143 = vst [vmem:[%s3] ss:$8 sm:$0xf] %v135
    %144 = vst [vmem:[%s3] ss:$8 sm:$0xf0] %v135
    %s145 = scalar_lea.vmem %s3, 64
    %146 = vst [vmem:[%s145] ss:$8 sm:$0xf] %v136
    %147 = vst [vmem:[%s145] ss:$8 sm:$0xf0] %v136
    %s148 = scalar_lea.vmem %s3, 128
    %149 = vst [vmem:[%s148] ss:$8 sm:$0xf] %v137
    %150 = vst [vmem:[%s148] ss:$8 sm:$0xf0] %v137
    %s151 = scalar_lea.vmem %s3, 192
    %152 = vst [vmem:[%s151] ss:$8 sm:$0xf] %v138
    %153 = vst [vmem:[%s151] ss:$8 sm:$0xf0] %v138
    %s154 = scalar_lea.vmem %s3, 512
    %155 = vst [vmem:[%s154] ss:$8 sm:$0xf] %v139
    %156 = vst [vmem:[%s154] ss:$8 sm:$0xf0] %v139
    %s157 = scalar_lea.vmem %s3, 576
    %158 = vst [vmem:[%s157] ss:$8 sm:$0xf] %v140
    %159 = vst [vmem:[%s157] ss:$8 sm:$0xf0] %v140
    %s160 = scalar_lea.vmem %s3, 640
    %161 = vst [vmem:[%s160] ss:$8 sm:$0xf] %v141
    %162 = vst [vmem:[%s160] ss:$8 sm:$0xf0] %v141
    %s163 = scalar_lea.vmem %s3, 704
    %164 = vst [vmem:[%s163] ss:$8 sm:$0xf] %v142
    %165 = vst [vmem:[%s163] ss:$8 sm:$0xf0] %v142
    %s166 = sld [smem:[#allocation2 + $0x3]]
    %v167 = vstv %s166
    %v168 = vmul.f32 %v39, %v167
    %v169 = vmul.f32 %v41, %v167
    %v170 = vmul.f32 %v43, %v167
    %v171 = vmul.f32 %v45, %v167
    %v172 = vmul.f32 %v47, %v167
    %v173 = vmul.f32 %v49, %v167
    %v174 = vmul.f32 %v51, %v167
    %v175 = vmul.f32 %v53, %v167
    %s176 = sld [smem:[#allocation2 + $0x4]]
    %v177 = vstv %s176
    %v178 = vmul.f32 %v55, %v177
    %v179 = vmul.f32 %v57, %v177
    %v180 = vmul.f32 %v59, %v177
    %v181 = vmul.f32 %v61, %v177
    %v182 = vmul.f32 %v63, %v177
    %v183 = vmul.f32 %v65, %v177
    %v184 = vmul.f32 %v67, %v177
    %v185 = vmul.f32 %v69, %v177
    %v186 = vadd.f32 %v168, %v178
    %v187 = vadd.f32 %v169, %v179
    %v188 = vadd.f32 %v170, %v180
    %v189 = vadd.f32 %v171, %v181
    %v190 = vadd.f32 %v172, %v182
    %v191 = vadd.f32 %v173, %v183
    %v192 = vadd.f32 %v174, %v184
    %v193 = vadd.f32 %v175, %v185
    %s194 = sld [smem:[#allocation2 + $0x5]]
    %v195 = vstv %s194
    %v196 = vmul.f32 %v71, %v195
    %v197 = vmul.f32 %v73, %v195
    %v198 = vmul.f32 %v75, %v195
    %v199 = vmul.f32 %v77, %v195
    %v200 = vmul.f32 %v79, %v195
    %v201 = vmul.f32 %v81, %v195
    %v202 = vmul.f32 %v83, %v195
    %v203 = vmul.f32 %v85, %v195
    %v204 = vadd.f32 %v186, %v196
    %v205 = vadd.f32 %v187, %v197
    %v206 = vadd.f32 %v188, %v198
    %v207 = vadd.f32 %v189, %v199
    %v208 = vadd.f32 %v190, %v200
    %v209 = vadd.f32 %v191, %v201
    %v210 = vadd.f32 %v192, %v202
    %v211 = vadd.f32 %v193, %v203
    %s212 = sld [smem:[#allocation4 + $0x1]]
    %s213 = sadd.f32 %s212, 3.0
    %v214 = vstv %s213
    %v215 = vadd.f32 %v204, %v214
    %v216 = vadd.f32 %v205, %v214
    %v217 = vadd.f32 %v206, %v214
    %v218 = vadd.f32 %v207, %v214
    %v219 = vadd.f32 %v208, %v214
    %v220 = vadd.f32 %v209, %v214
    %v221 = vadd.f32 %v210, %v214
    %v222 = vadd.f32 %v211, %v214
    %s223 = scalar_lea.vmem %s3, 1
    %224 = vst [vmem:[%s223] ss:$8 sm:$0xf] %v215
    %225 = vst [vmem:[%s223] ss:$8 sm:$0xf0] %v215
    %s226 = scalar_lea.vmem %s3, 65
    %227 = vst [vmem:[%s226] ss:$8 sm:$0xf] %v216
    %228 = vst [vmem:[%s226] ss:$8 sm:$0xf0] %v216
    %s229 = scalar_lea.vmem %s3, 129
    %230 = vst [vmem:[%s229] ss:$8 sm:$0xf] %v217
    %231 = vst [vmem:[%s229] ss:$8 sm:$0xf0] %v217
    %s232 = scalar_lea.vmem %s3, 193
    %233 = vst [vmem:[%s232] ss:$8 sm:$0xf] %v218
    %234 = vst [vmem:[%s232] ss:$8 sm:$0xf0] %v218
    %s235 = scalar_lea.vmem %s3, 513
    %236 = vst [vmem:[%s235] ss:$8 sm:$0xf] %v219
    %237 = vst [vmem:[%s235] ss:$8 sm:$0xf0] %v219
    %s238 = scalar_lea.vmem %s3, 577
    %239 = vst [vmem:[%s238] ss:$8 sm:$0xf] %v220
    %240 = vst [vmem:[%s238] ss:$8 sm:$0xf0] %v220
    %s241 = scalar_lea.vmem %s3, 641
    %242 = vst [vmem:[%s241] ss:$8 sm:$0xf] %v221
    %243 = vst [vmem:[%s241] ss:$8 sm:$0xf0] %v221
    %s244 = scalar_lea.vmem %s3, 705
    %245 = vst [vmem:[%s244] ss:$8 sm:$0xf] %v222
    %246 = vst [vmem:[%s244] ss:$8 sm:$0xf0] %v222
    %s247 = sld [smem:[#allocation2 + $0x6]]
    %v248 = vstv %s247
    %v249 = vmul.f32 %v39, %v248
    %v250 = vmul.f32 %v41, %v248
    %v251 = vmul.f32 %v43, %v248
    %v252 = vmul.f32 %v45, %v248
    %v253 = vmul.f32 %v47, %v248
    %v254 = vmul.f32 %v49, %v248
    %v255 = vmul.f32 %v51, %v248
    %v256 = vmul.f32 %v53, %v248
    %s257 = sld [smem:[#allocation2 + $0x7]]
    %v258 = vstv %s257
    %v259 = vmul.f32 %v55, %v258
    %v260 = vmul.f32 %v57, %v258
    %v261 = vmul.f32 %v59, %v258
    %v262 = vmul.f32 %v61, %v258
    %v263 = vmul.f32 %v63, %v258
    %v264 = vmul.f32 %v65, %v258
    %v265 = vmul.f32 %v67, %v258
    %v266 = vmul.f32 %v69, %v258
    %v267 = vadd.f32 %v249, %v259
    %v268 = vadd.f32 %v250, %v260
    %v269 = vadd.f32 %v251, %v261
    %v270 = vadd.f32 %v252, %v262
    %v271 = vadd.f32 %v253, %v263
    %v272 = vadd.f32 %v254, %v264
    %v273 = vadd.f32 %v255, %v265
    %v274 = vadd.f32 %v256, %v266
    %s275 = sld [smem:[#allocation2 + $0x8]]
    %v276 = vstv %s275
    %v277 = vmul.f32 %v71, %v276
    %v278 = vmul.f32 %v73, %v276
    %v279 = vmul.f32 %v75, %v276
    %v280 = vmul.f32 %v77, %v276
    %v281 = vmul.f32 %v79, %v276
    %v282 = vmul.f32 %v81, %v276
    %v283 = vmul.f32 %v83, %v276
    %v284 = vmul.f32 %v85, %v276
    %v285 = vadd.f32 %v267, %v277
    %v286 = vadd.f32 %v268, %v278
    %v287 = vadd.f32 %v269, %v279
    %v288 = vadd.f32 %v270, %v280
    %v289 = vadd.f32 %v271, %v281
    %v290 = vadd.f32 %v272, %v282
    %v291 = vadd.f32 %v273, %v283
    %v292 = vadd.f32 %v274, %v284
    %s293 = sld [smem:[#allocation4 + $0x2]]
    %s294 = sadd.f32 %s293, 3.0
    %v295 = vstv %s294
    %v296 = vadd.f32 %v285, %v295
    %v297 = vadd.f32 %v286, %v295
    %v298 = vadd.f32 %v287, %v295
    %v299 = vadd.f32 %v288, %v295
    %v300 = vadd.f32 %v289, %v295
    %v301 = vadd.f32 %v290, %v295
    %v302 = vadd.f32 %v291, %v295
    %v303 = vadd.f32 %v292, %v295
    %s304 = scalar_lea.vmem %s3, 2
    %305 = vst [vmem:[%s304] ss:$8 sm:$0xf] %v296
    %306 = vst [vmem:[%s304] ss:$8 sm:$0xf0] %v296
    %s307 = scalar_lea.vmem %s3, 66
    %308 = vst [vmem:[%s307] ss:$8 sm:$0xf] %v297
    %309 = vst [vmem:[%s307] ss:$8 sm:$0xf0] %v297
    %s310 = scalar_lea.vmem %s3, 130
    %311 = vst [vmem:[%s310] ss:$8 sm:$0xf] %v298
    %312 = vst [vmem:[%s310] ss:$8 sm:$0xf0] %v298
    %s313 = scalar_lea.vmem %s3, 194
    %314 = vst [vmem:[%s313] ss:$8 sm:$0xf] %v299
    %315 = vst [vmem:[%s313] ss:$8 sm:$0xf0] %v299
    %s316 = scalar_lea.vmem %s3, 514
    %317 = vst [vmem:[%s316] ss:$8 sm:$0xf] %v300
    %318 = vst [vmem:[%s316] ss:$8 sm:$0xf0] %v300
    %s319 = scalar_lea.vmem %s3, 578
    %320 = vst [vmem:[%s319] ss:$8 sm:$0xf] %v301
    %321 = vst [vmem:[%s319] ss:$8 sm:$0xf0] %v301
    %s322 = scalar_lea.vmem %s3, 642
    %323 = vst [vmem:[%s322] ss:$8 sm:$0xf] %v302
    %324 = vst [vmem:[%s322] ss:$8 sm:$0xf0] %v302
    %s325 = scalar_lea.vmem %s3, 706
    %326 = vst [vmem:[%s325] ss:$8 sm:$0xf] %v303
    %327 = vst [vmem:[%s325] ss:$8 sm:$0xf0] %v303
    %s328 = sld [smem:[#allocation2 + $0x9]]
    %v329 = vstv %s328
    %v330 = vmul.f32 %v39, %v329
    %v331 = vmul.f32 %v41, %v329
    %v332 = vmul.f32 %v43, %v329
    %v333 = vmul.f32 %v45, %v329
    %v334 = vmul.f32 %v47, %v329
    %v335 = vmul.f32 %v49, %v329
    %v336 = vmul.f32 %v51, %v329
    %v337 = vmul.f32 %v53, %v329
    %s338 = sld [smem:[#allocation2 + $0xa]]
    %v339 = vstv %s338
    %v340 = vmul.f32 %v55, %v339
    %v341 = vmul.f32 %v57, %v339
    %v342 = vmul.f32 %v59, %v339
    %v343 = vmul.f32 %v61, %v339
    %v344 = vmul.f32 %v63, %v339
    %v345 = vmul.f32 %v65, %v339
    %v346 = vmul.f32 %v67, %v339
    %v347 = vmul.f32 %v69, %v339
    %v348 = vadd.f32 %v330, %v340
    %v349 = vadd.f32 %v331, %v341
    %v350 = vadd.f32 %v332, %v342
    %v351 = vadd.f32 %v333, %v343
    %v352 = vadd.f32 %v334, %v344
    %v353 = vadd.f32 %v335, %v345
    %v354 = vadd.f32 %v336, %v346
    %v355 = vadd.f32 %v337, %v347
    %s356 = sld [smem:[#allocation2 + $0xb]]
    %v357 = vstv %s356
    %v358 = vmul.f32 %v71, %v357
    %v359 = vmul.f32 %v73, %v357
    %v360 = vmul.f32 %v75, %v357
    %v361 = vmul.f32 %v77, %v357
    %v362 = vmul.f32 %v79, %v357
    %v363 = vmul.f32 %v81, %v357
    %v364 = vmul.f32 %v83, %v357
    %v365 = vmul.f32 %v85, %v357
    %v366 = vadd.f32 %v348, %v358
    %v367 = vadd.f32 %v349, %v359
    %v368 = vadd.f32 %v350, %v360
    %v369 = vadd.f32 %v351, %v361
    %v370 = vadd.f32 %v352, %v362
    %v371 = vadd.f32 %v353, %v363
    %v372 = vadd.f32 %v354, %v364
    %v373 = vadd.f32 %v355, %v365
    %s374 = sld [smem:[#allocation4 + $0x3]]
    %s375 = sadd.f32 %s374, 3.0
    %v376 = vstv %s375
    %v377 = vadd.f32 %v366, %v376
    %v378 = vadd.f32 %v367, %v376
    %v379 = vadd.f32 %v368, %v376
    %v380 = vadd.f32 %v369, %v376
    %v381 = vadd.f32 %v370, %v376
    %v382 = vadd.f32 %v371, %v376
    %v383 = vadd.f32 %v372, %v376
    %v384 = vadd.f32 %v373, %v376
    %s385 = scalar_lea.vmem %s3, 3
    %386 = vst [vmem:[%s385] ss:$8 sm:$0xf] %v377
    %387 = vst [vmem:[%s385] ss:$8 sm:$0xf0] %v377
    %s388 = scalar_lea.vmem %s3, 67
    %389 = vst [vmem:[%s388] ss:$8 sm:$0xf] %v378
    %390 = vst [vmem:[%s388] ss:$8 sm:$0xf0] %v378
    %s391 = scalar_lea.vmem %s3, 131
    %392 = vst [vmem:[%s391] ss:$8 sm:$0xf] %v379
    %393 = vst [vmem:[%s391] ss:$8 sm:$0xf0] %v379
    %s394 = scalar_lea.vmem %s3, 195
    %395 = vst [vmem:[%s394] ss:$8 sm:$0xf] %v380
    %396 = vst [vmem:[%s394] ss:$8 sm:$0xf0] %v380
    %s397 = scalar_lea.vmem %s3, 515
    %398 = vst [vmem:[%s397] ss:$8 sm:$0xf] %v381
    %399 = vst [vmem:[%s397] ss:$8 sm:$0xf0] %v381
    %s400 = scalar_lea.vmem %s3, 579
    %401 = vst [vmem:[%s400] ss:$8 sm:$0xf] %v382
    %402 = vst [vmem:[%s400] ss:$8 sm:$0xf0] %v382
    %s403 = scalar_lea.vmem %s3, 643
    %404 = vst [vmem:[%s403] ss:$8 sm:$0xf] %v383
    %405 = vst [vmem:[%s403] ss:$8 sm:$0xf0] %v383
    %s406 = scalar_lea.vmem %s3, 707
    %407 = vst [vmem:[%s406] ss:$8 sm:$0xf] %v384
    %408 = vst [vmem:[%s406] ss:$8 sm:$0xf0] %v384
    %s409 = sld [smem:[#allocation2 + $0xc]]
    %v410 = vstv %s409
    %v411 = vmul.f32 %v39, %v410
    %v412 = vmul.f32 %v41, %v410
    %v413 = vmul.f32 %v43, %v410
    %v414 = vmul.f32 %v45, %v410
    %v415 = vmul.f32 %v47, %v410
    %v416 = vmul.f32 %v49, %v410
    %v417 = vmul.f32 %v51, %v410
    %v418 = vmul.f32 %v53, %v410
    %s419 = sld [smem:[#allocation2 + $0xd]]
    %v420 = vstv %s419
    %v421 = vmul.f32 %v55, %v420
    %v422 = vmul.f32 %v57, %v420
    %v423 = vmul.f32 %v59, %v420
    %v424 = vmul.f32 %v61, %v420
    %v425 = vmul.f32 %v63, %v420
    %v426 = vmul.f32 %v65, %v420
    %v427 = vmul.f32 %v67, %v420
    %v428 = vmul.f32 %v69, %v420
    %v429 = vadd.f32 %v411, %v421
    %v430 = vadd.f32 %v412, %v422
    %v431 = vadd.f32 %v413, %v423
    %v432 = vadd.f32 %v414, %v424
    %v433 = vadd.f32 %v415, %v425
    %v434 = vadd.f32 %v416, %v426
    %v435 = vadd.f32 %v417, %v427
    %v436 = vadd.f32 %v418, %v428
    %s437 = sld [smem:[#allocation2 + $0xe]]
    %v438 = vstv %s437
    %v439 = vmul.f32 %v71, %v438
    %v440 = vmul.f32 %v73, %v438
    %v441 = vmul.f32 %v75, %v438
    %v442 = vmul.f32 %v77, %v438
    %v443 = vmul.f32 %v79, %v438
    %v444 = vmul.f32 %v81, %v438
    %v445 = vmul.f32 %v83, %v438
    %v446 = vmul.f32 %v85, %v438
    %v447 = vadd.f32 %v429, %v439
    %v448 = vadd.f32 %v430, %v440
    %v449 = vadd.f32 %v431, %v441
    %v450 = vadd.f32 %v432, %v442
    %v451 = vadd.f32 %v433, %v443
    %v452 = vadd.f32 %v434, %v444
    %v453 = vadd.f32 %v435, %v445
    %v454 = vadd.f32 %v436, %v446
    %s455 = sld [smem:[#allocation4 + $0x4]]
    %s456 = sadd.f32 %s455, 3.0
    %v457 = vstv %s456
    %v458 = vadd.f32 %v447, %v457
    %v459 = vadd.f32 %v448, %v457
    %v460 = vadd.f32 %v449, %v457
    %v461 = vadd.f32 %v450, %v457
    %v462 = vadd.f32 %v451, %v457
    %v463 = vadd.f32 %v452, %v457
    %v464 = vadd.f32 %v453, %v457
    %v465 = vadd.f32 %v454, %v457
    %s466 = scalar_lea.vmem %s3, 4
    %467 = vst [vmem:[%s466] ss:$8 sm:$0xf] %v458
    %468 = vst [vmem:[%s466] ss:$8 sm:$0xf0] %v458
    %s469 = scalar_lea.vmem %s3, 68
    %470 = vst [vmem:[%s469] ss:$8 sm:$0xf] %v459
    %471 = vst [vmem:[%s469] ss:$8 sm:$0xf0] %v459
    %s472 = scalar_lea.vmem %s3, 132
    %473 = vst [vmem:[%s472] ss:$8 sm:$0xf] %v460
    %474 = vst [vmem:[%s472] ss:$8 sm:$0xf0] %v460
    %s475 = scalar_lea.vmem %s3, 196
    %476 = vst [vmem:[%s475] ss:$8 sm:$0xf] %v461
    %477 = vst [vmem:[%s475] ss:$8 sm:$0xf0] %v461
    %s478 = scalar_lea.vmem %s3, 516
    %479 = vst [vmem:[%s478] ss:$8 sm:$0xf] %v462
    %480 = vst [vmem:[%s478] ss:$8 sm:$0xf0] %v462
    %s481 = scalar_lea.vmem %s3, 580
    %482 = vst [vmem:[%s481] ss:$8 sm:$0xf] %v463
    %483 = vst [vmem:[%s481] ss:$8 sm:$0xf0] %v463
    %s484 = scalar_lea.vmem %s3, 644
    %485 = vst [vmem:[%s484] ss:$8 sm:$0xf] %v464
    %486 = vst [vmem:[%s484] ss:$8 sm:$0xf0] %v464
    %s487 = scalar_lea.vmem %s3, 708
    %488 = vst [vmem:[%s487] ss:$8 sm:$0xf] %v465
    %489 = vst [vmem:[%s487] ss:$8 sm:$0xf0] %v465
    %s490 = sld [smem:[#allocation2 + $0xf]]
    %v491 = vstv %s490
    %v492 = vmul.f32 %v39, %v491
    %v493 = vmul.f32 %v41, %v491
    %v494 = vmul.f32 %v43, %v491
    %v495 = vmul.f32 %v45, %v491
    %v496 = vmul.f32 %v47, %v491
    %v497 = vmul.f32 %v49, %v491
    %v498 = vmul.f32 %v51, %v491
    %v499 = vmul.f32 %v53, %v491
    %s500 = sld [smem:[#allocation2 + $0x10]]
    %v501 = vstv %s500
    %v502 = vmul.f32 %v55, %v501
    %v503 = vmul.f32 %v57, %v501
    %v504 = vmul.f32 %v59, %v501
    %v505 = vmul.f32 %v61, %v501
    %v506 = vmul.f32 %v63, %v501
    %v507 = vmul.f32 %v65, %v501
    %v508 = vmul.f32 %v67, %v501
    %v509 = vmul.f32 %v69, %v501
    %v510 = vadd.f32 %v492, %v502
    %v511 = vadd.f32 %v493, %v503
    %v512 = vadd.f32 %v494, %v504
    %v513 = vadd.f32 %v495, %v505
    %v514 = vadd.f32 %v496, %v506
    %v515 = vadd.f32 %v497, %v507
    %v516 = vadd.f32 %v498, %v508
    %v517 = vadd.f32 %v499, %v509
    %s518 = sld [smem:[#allocation2 + $0x11]]
    %v519 = vstv %s518
    %v520 = vmul.f32 %v71, %v519
    %v521 = vmul.f32 %v73, %v519
    %v522 = vmul.f32 %v75, %v519
    %v523 = vmul.f32 %v77, %v519
    %v524 = vmul.f32 %v79, %v519
    %v525 = vmul.f32 %v81, %v519
    %v526 = vmul.f32 %v83, %v519
    %v527 = vmul.f32 %v85, %v519
    %v528 = vadd.f32 %v510, %v520
    %v529 = vadd.f32 %v511, %v521
    %v530 = vadd.f32 %v512, %v522
    %v531 = vadd.f32 %v513, %v523
    %v532 = vadd.f32 %v514, %v524
    %v533 = vadd.f32 %v515, %v525
    %v534 = vadd.f32 %v516, %v526
    %v535 = vadd.f32 %v517, %v527
    %s536 = sld [smem:[#allocation4 + $0x5]]
    %s537 = sadd.f32 %s536, 3.0
    %v538 = vstv %s537
    %v539 = vadd.f32 %v528, %v538
    %v540 = vadd.f32 %v529, %v538
    %v541 = vadd.f32 %v530, %v538
    %v542 = vadd.f32 %v531, %v538
    %v543 = vadd.f32 %v532, %v538
    %v544 = vadd.f32 %v533, %v538
    %v545 = vadd.f32 %v534, %v538
    %v546 = vadd.f32 %v535, %v538
    %s547 = scalar_lea.vmem %s3, 5
    %548 = vst [vmem:[%s547] ss:$8 sm:$0xf] %v539
    %549 = vst [vmem:[%s547] ss:$8 sm:$0xf0] %v539
    %s550 = scalar_lea.vmem %s3, 69
    %551 = vst [vmem:[%s550] ss:$8 sm:$0xf] %v540
    %552 = vst [vmem:[%s550] ss:$8 sm:$0xf0] %v540
    %s553 = scalar_lea.vmem %s3, 133
    %554 = vst [vmem:[%s553] ss:$8 sm:$0xf] %v541
    %555 = vst [vmem:[%s553] ss:$8 sm:$0xf0] %v541
    %s556 = scalar_lea.vmem %s3, 197
    %557 = vst [vmem:[%s556] ss:$8 sm:$0xf] %v542
    %558 = vst [vmem:[%s556] ss:$8 sm:$0xf0] %v542
    %s559 = scalar_lea.vmem %s3, 517
    %560 = vst [vmem:[%s559] ss:$8 sm:$0xf] %v543
    %561 = vst [vmem:[%s559] ss:$8 sm:$0xf0] %v543
    %s562 = scalar_lea.vmem %s3, 581
    %563 = vst [vmem:[%s562] ss:$8 sm:$0xf] %v544
    %564 = vst [vmem:[%s562] ss:$8 sm:$0xf0] %v544
    %s565 = scalar_lea.vmem %s3, 645
    %566 = vst [vmem:[%s565] ss:$8 sm:$0xf] %v545
    %567 = vst [vmem:[%s565] ss:$8 sm:$0xf0] %v545
    %s568 = scalar_lea.vmem %s3, 709
    %569 = vst [vmem:[%s568] ss:$8 sm:$0xf] %v546
    %570 = vst [vmem:[%s568] ss:$8 sm:$0xf0] %v546
    %s571 = sld [smem:[#allocation2 + $0x12]]
    %v572 = vstv %s571
    %v573 = vmul.f32 %v39, %v572
    %v574 = vmul.f32 %v41, %v572
    %v575 = vmul.f32 %v43, %v572
    %v576 = vmul.f32 %v45, %v572
    %v577 = vmul.f32 %v47, %v572
    %v578 = vmul.f32 %v49, %v572
    %v579 = vmul.f32 %v51, %v572
    %v580 = vmul.f32 %v53, %v572
    %s581 = sld [smem:[#allocation2 + $0x13]]
    %v582 = vstv %s581
    %v583 = vmul.f32 %v55, %v582
    %v584 = vmul.f32 %v57, %v582
    %v585 = vmul.f32 %v59, %v582
    %v586 = vmul.f32 %v61, %v582
    %v587 = vmul.f32 %v63, %v582
    %v588 = vmul.f32 %v65, %v582
    %v589 = vmul.f32 %v67, %v582
    %v590 = vmul.f32 %v69, %v582
    %v591 = vadd.f32 %v573, %v583
    %v592 = vadd.f32 %v574, %v584
    %v593 = vadd.f32 %v575, %v585
    %v594 = vadd.f32 %v576, %v586
    %v595 = vadd.f32 %v577, %v587
    %v596 = vadd.f32 %v578, %v588
    %v597 = vadd.f32 %v579, %v589
    %v598 = vadd.f32 %v580, %v590
    %s599 = sld [smem:[#allocation2 + $0x14]]
    %v600 = vstv %s599
    %v601 = vmul.f32 %v71, %v600
    %v602 = vmul.f32 %v73, %v600
    %v603 = vmul.f32 %v75, %v600
    %v604 = vmul.f32 %v77, %v600
    %v605 = vmul.f32 %v79, %v600
    %v606 = vmul.f32 %v81, %v600
    %v607 = vmul.f32 %v83, %v600
    %v608 = vmul.f32 %v85, %v600
    %v609 = vadd.f32 %v591, %v601
    %v610 = vadd.f32 %v592, %v602
    %v611 = vadd.f32 %v593, %v603
    %v612 = vadd.f32 %v594, %v604
    %v613 = vadd.f32 %v595, %v605
    %v614 = vadd.f32 %v596, %v606
    %v615 = vadd.f32 %v597, %v607
    %v616 = vadd.f32 %v598, %v608
    %s617 = sld [smem:[#allocation4 + $0x6]]
    %s618 = sadd.f32 %s617, 3.0
    %v619 = vstv %s618
    %v620 = vadd.f32 %v609, %v619
    %v621 = vadd.f32 %v610, %v619
    %v622 = vadd.f32 %v611, %v619
    %v623 = vadd.f32 %v612, %v619
    %v624 = vadd.f32 %v613, %v619
    %v625 = vadd.f32 %v614, %v619
    %v626 = vadd.f32 %v615, %v619
    %v627 = vadd.f32 %v616, %v619
    %s628 = scalar_lea.vmem %s3, 6
    %629 = vst [vmem:[%s628] ss:$8 sm:$0xf] %v620
    %630 = vst [vmem:[%s628] ss:$8 sm:$0xf0] %v620
    %s631 = scalar_lea.vmem %s3, 70
    %632 = vst [vmem:[%s631] ss:$8 sm:$0xf] %v621
    %633 = vst [vmem:[%s631] ss:$8 sm:$0xf0] %v621
    %s634 = scalar_lea.vmem %s3, 134
    %635 = vst [vmem:[%s634] ss:$8 sm:$0xf] %v622
    %636 = vst [vmem:[%s634] ss:$8 sm:$0xf0] %v622
    %s637 = scalar_lea.vmem %s3, 198
    %638 = vst [vmem:[%s637] ss:$8 sm:$0xf] %v623
    %639 = vst [vmem:[%s637] ss:$8 sm:$0xf0] %v623
    %s640 = scalar_lea.vmem %s3, 518
    %641 = vst [vmem:[%s640] ss:$8 sm:$0xf] %v624
    %642 = vst [vmem:[%s640] ss:$8 sm:$0xf0] %v624
    %s643 = scalar_lea.vmem %s3, 582
    %644 = vst [vmem:[%s643] ss:$8 sm:$0xf] %v625
    %645 = vst [vmem:[%s643] ss:$8 sm:$0xf0] %v625
    %s646 = scalar_lea.vmem %s3, 646
    %647 = vst [vmem:[%s646] ss:$8 sm:$0xf] %v626
    %648 = vst [vmem:[%s646] ss:$8 sm:$0xf0] %v626
    %s649 = scalar_lea.vmem %s3, 710
    %650 = vst [vmem:[%s649] ss:$8 sm:$0xf] %v627
    %651 = vst [vmem:[%s649] ss:$8 sm:$0xf0] %v627
    %s652 = sld [smem:[#allocation2 + $0x15]]
    %v653 = vstv %s652
    %v654 = vmul.f32 %v39, %v653
    %v655 = vmul.f32 %v41, %v653
    %v656 = vmul.f32 %v43, %v653
    %v657 = vmul.f32 %v45, %v653
    %v658 = vmul.f32 %v47, %v653
    %v659 = vmul.f32 %v49, %v653
    %v660 = vmul.f32 %v51, %v653
    %v661 = vmul.f32 %v53, %v653
    %s662 = sld [smem:[#allocation2 + $0x16]]
    %v663 = vstv %s662
    %v664 = vmul.f32 %v55, %v663
    %v665 = vmul.f32 %v57, %v663
    %v666 = vmul.f32 %v59, %v663
    %v667 = vmul.f32 %v61, %v663
    %v668 = vmul.f32 %v63, %v663
    %v669 = vmul.f32 %v65, %v663
    %v670 = vmul.f32 %v67, %v663
    %v671 = vmul.f32 %v69, %v663
    %v672 = vadd.f32 %v654, %v664
    %v673 = vadd.f32 %v655, %v665
    %v674 = vadd.f32 %v656, %v666
    %v675 = vadd.f32 %v657, %v667
    %v676 = vadd.f32 %v658, %v668
    %v677 = vadd.f32 %v659, %v669
    %v678 = vadd.f32 %v660, %v670
    %v679 = vadd.f32 %v661, %v671
    %s680 = sld [smem:[#allocation2 + $0x17]]
    %v681 = vstv %s680
    %v682 = vmul.f32 %v71, %v681
    %v683 = vmul.f32 %v73, %v681
    %v684 = vmul.f32 %v75, %v681
    %v685 = vmul.f32 %v77, %v681
    %v686 = vmul.f32 %v79, %v681
    %v687 = vmul.f32 %v81, %v681
    %v688 = vmul.f32 %v83, %v681
    %v689 = vmul.f32 %v85, %v681
    %v690 = vadd.f32 %v672, %v682
    %v691 = vadd.f32 %v673, %v683
    %v692 = vadd.f32 %v674, %v684
    %v693 = vadd.f32 %v675, %v685
    %v694 = vadd.f32 %v676, %v686
    %v695 = vadd.f32 %v677, %v687
    %v696 = vadd.f32 %v678, %v688
    %v697 = vadd.f32 %v679, %v689
    %s698 = sld [smem:[#allocation4 + $0x7]]
    %s699 = sadd.f32 %s698, 3.0
    %v700 = vstv %s699
    %v701 = vadd.f32 %v690, %v700
    %v702 = vadd.f32 %v691, %v700
    %v703 = vadd.f32 %v692, %v700
    %v704 = vadd.f32 %v693, %v700
    %v705 = vadd.f32 %v694, %v700
    %v706 = vadd.f32 %v695, %v700
    %v707 = vadd.f32 %v696, %v700
    %v708 = vadd.f32 %v697, %v700
    %s709 = scalar_lea.vmem %s3, 7
    %710 = vst [vmem:[%s709] ss:$8 sm:$0xf] %v701
    %711 = vst [vmem:[%s709] ss:$8 sm:$0xf0] %v701
    %s712 = scalar_lea.vmem %s3, 71
    %713 = vst [vmem:[%s712] ss:$8 sm:$0xf] %v702
    %714 = vst [vmem:[%s712] ss:$8 sm:$0xf0] %v702
    %s715 = scalar_lea.vmem %s3, 135
    %716 = vst [vmem:[%s715] ss:$8 sm:$0xf] %v703
    %717 = vst [vmem:[%s715] ss:$8 sm:$0xf0] %v703
    %s718 = scalar_lea.vmem %s3, 199
    %719 = vst [vmem:[%s718] ss:$8 sm:$0xf] %v704
    %720 = vst [vmem:[%s718] ss:$8 sm:$0xf0] %v704
    %s721 = scalar_lea.vmem %s3, 519
    %722 = vst [vmem:[%s721] ss:$8 sm:$0xf] %v705
    %723 = vst [vmem:[%s721] ss:$8 sm:$0xf0] %v705
    %s724 = scalar_lea.vmem %s3, 583
    %725 = vst [vmem:[%s724] ss:$8 sm:$0xf] %v706
    %726 = vst [vmem:[%s724] ss:$8 sm:$0xf0] %v706
    %s727 = scalar_lea.vmem %s3, 647
    %728 = vst [vmem:[%s727] ss:$8 sm:$0xf] %v707
    %729 = vst [vmem:[%s727] ss:$8 sm:$0xf0] %v707
    %s730 = scalar_lea.vmem %s3, 711
    %731 = vst [vmem:[%s730] ss:$8 sm:$0xf] %v708
    %732 = vst [vmem:[%s730] ss:$8 sm:$0xf0] %v708
    %s733 = sld [smem:[#allocation2 + $0x18]]
    %v734 = vstv %s733
    %v735 = vmul.f32 %v39, %v734
    %v736 = vmul.f32 %v41, %v734
    %v737 = vmul.f32 %v43, %v734
    %v738 = vmul.f32 %v45, %v734
    %v739 = vmul.f32 %v47, %v734
    %v740 = vmul.f32 %v49, %v734
    %v741 = vmul.f32 %v51, %v734
    %v742 = vmul.f32 %v53, %v734
    %s743 = sld [smem:[#allocation2 + $0x19]]
    %v744 = vstv %s743
    %v745 = vmul.f32 %v55, %v744
    %v746 = vmul.f32 %v57, %v744
    %v747 = vmul.f32 %v59, %v744
    %v748 = vmul.f32 %v61, %v744
    %v749 = vmul.f32 %v63, %v744
    %v750 = vmul.f32 %v65, %v744
    %v751 = vmul.f32 %v67, %v744
    %v752 = vmul.f32 %v69, %v744
    %v753 = vadd.f32 %v735, %v745
    %v754 = vadd.f32 %v736, %v746
    %v755 = vadd.f32 %v737, %v747
    %v756 = vadd.f32 %v738, %v748
    %v757 = vadd.f32 %v739, %v749
    %v758 = vadd.f32 %v740, %v750
    %v759 = vadd.f32 %v741, %v751
    %v760 = vadd.f32 %v742, %v752
    %s761 = sld [smem:[#allocation2 + $0x1a]]
    %v762 = vstv %s761
    %v763 = vmul.f32 %v71, %v762
    %v764 = vmul.f32 %v73, %v762
    %v765 = vmul.f32 %v75, %v762
    %v766 = vmul.f32 %v77, %v762
    %v767 = vmul.f32 %v79, %v762
    %v768 = vmul.f32 %v81, %v762
    %v769 = vmul.f32 %v83, %v762
    %v770 = vmul.f32 %v85, %v762
    %v771 = vadd.f32 %v753, %v763
    %v772 = vadd.f32 %v754, %v764
    %v773 = vadd.f32 %v755, %v765
    %v774 = vadd.f32 %v756, %v766
    %v775 = vadd.f32 %v757, %v767
    %v776 = vadd.f32 %v758, %v768
    %v777 = vadd.f32 %v759, %v769
    %v778 = vadd.f32 %v760, %v770
    %s779 = sld [smem:[#allocation4 + $0x8]]
    %s780 = sadd.f32 %s779, 3.0
    %v781 = vstv %s780
    %v782 = vadd.f32 %v771, %v781
    %v783 = vadd.f32 %v772, %v781
    %v784 = vadd.f32 %v773, %v781
    %v785 = vadd.f32 %v774, %v781
    %v786 = vadd.f32 %v775, %v781
    %v787 = vadd.f32 %v776, %v781
    %v788 = vadd.f32 %v777, %v781
    %v789 = vadd.f32 %v778, %v781
    %s790 = scalar_lea.vmem %s3, 256
    %791 = vst [vmem:[%s790] ss:$8 sm:$0xf] %v782
    %792 = vst [vmem:[%s790] ss:$8 sm:$0xf0] %v782
    %s793 = scalar_lea.vmem %s3, 320
    %794 = vst [vmem:[%s793] ss:$8 sm:$0xf] %v783
    %795 = vst [vmem:[%s793] ss:$8 sm:$0xf0] %v783
    %s796 = scalar_lea.vmem %s3, 384
    %797 = vst [vmem:[%s796] ss:$8 sm:$0xf] %v784
    %798 = vst [vmem:[%s796] ss:$8 sm:$0xf0] %v784
    %s799 = scalar_lea.vmem %s3, 448
    %800 = vst [vmem:[%s799] ss:$8 sm:$0xf] %v785
    %801 = vst [vmem:[%s799] ss:$8 sm:$0xf0] %v785
    %s802 = scalar_lea.vmem %s3, 768
    %803 = vst [vmem:[%s802] ss:$8 sm:$0xf] %v786
    %804 = vst [vmem:[%s802] ss:$8 sm:$0xf0] %v786
    %s805 = scalar_lea.vmem %s3, 832
    %806 = vst [vmem:[%s805] ss:$8 sm:$0xf] %v787
    %807 = vst [vmem:[%s805] ss:$8 sm:$0xf0] %v787
    %s808 = scalar_lea.vmem %s3, 896
    %809 = vst [vmem:[%s808] ss:$8 sm:$0xf] %v788
    %810 = vst [vmem:[%s808] ss:$8 sm:$0xf0] %v788
    %s811 = scalar_lea.vmem %s3, 960
    %812 = vst [vmem:[%s811] ss:$8 sm:$0xf] %v789
    %813 = vst [vmem:[%s811] ss:$8 sm:$0xf0] %v789
    %s814 = sld [smem:[#allocation2 + $0x1b]]
    %v815 = vstv %s814
    %v816 = vmul.f32 %v39, %v815
    %v817 = vmul.f32 %v41, %v815
    %v818 = vmul.f32 %v43, %v815
    %v819 = vmul.f32 %v45, %v815
    %v820 = vmul.f32 %v47, %v815
    %v821 = vmul.f32 %v49, %v815
    %v822 = vmul.f32 %v51, %v815
    %v823 = vmul.f32 %v53, %v815
    %s824 = sld [smem:[#allocation2 + $0x1c]]
    %v825 = vstv %s824
    %v826 = vmul.f32 %v55, %v825
    %v827 = vmul.f32 %v57, %v825
    %v828 = vmul.f32 %v59, %v825
    %v829 = vmul.f32 %v61, %v825
    %v830 = vmul.f32 %v63, %v825
    %v831 = vmul.f32 %v65, %v825
    %v832 = vmul.f32 %v67, %v825
    %v833 = vmul.f32 %v69, %v825
    %v834 = vadd.f32 %v816, %v826
    %v835 = vadd.f32 %v817, %v827
    %v836 = vadd.f32 %v818, %v828
    %v837 = vadd.f32 %v819, %v829
    %v838 = vadd.f32 %v820, %v830
    %v839 = vadd.f32 %v821, %v831
    %v840 = vadd.f32 %v822, %v832
    %v841 = vadd.f32 %v823, %v833
    %s842 = sld [smem:[#allocation2 + $0x1d]]
    %v843 = vstv %s842
    %v844 = vmul.f32 %v71, %v843
    %v845 = vmul.f32 %v73, %v843
    %v846 = vmul.f32 %v75, %v843
    %v847 = vmul.f32 %v77, %v843
    %v848 = vmul.f32 %v79, %v843
    %v849 = vmul.f32 %v81, %v843
    %v850 = vmul.f32 %v83, %v843
    %v851 = vmul.f32 %v85, %v843
    %v852 = vadd.f32 %v834, %v844
    %v853 = vadd.f32 %v835, %v845
    %v854 = vadd.f32 %v836, %v846
    %v855 = vadd.f32 %v837, %v847
    %v856 = vadd.f32 %v838, %v848
    %v857 = vadd.f32 %v839, %v849
    %v858 = vadd.f32 %v840, %v850
    %v859 = vadd.f32 %v841, %v851
    %s860 = sld [smem:[#allocation4 + $0x9]]
    %s861 = sadd.f32 %s860, 3.0
    %v862 = vstv %s861
    %v863 = vadd.f32 %v852, %v862
    %v864 = vadd.f32 %v853, %v862
    %v865 = vadd.f32 %v854, %v862
    %v866 = vadd.f32 %v855, %v862
    %v867 = vadd.f32 %v856, %v862
    %v868 = vadd.f32 %v857, %v862
    %v869 = vadd.f32 %v858, %v862
    %v870 = vadd.f32 %v859, %v862
    %s871 = scalar_lea.vmem %s3, 257
    %872 = vst [vmem:[%s871] ss:$8 sm:$0xf] %v863
    %873 = vst [vmem:[%s871] ss:$8 sm:$0xf0] %v863
    %s874 = scalar_lea.vmem %s3, 321
    %875 = vst [vmem:[%s874] ss:$8 sm:$0xf] %v864
    %876 = vst [vmem:[%s874] ss:$8 sm:$0xf0] %v864
    %s877 = scalar_lea.vmem %s3, 385
    %878 = vst [vmem:[%s877] ss:$8 sm:$0xf] %v865
    %879 = vst [vmem:[%s877] ss:$8 sm:$0xf0] %v865
    %s880 = scalar_lea.vmem %s3, 449
    %881 = vst [vmem:[%s880] ss:$8 sm:$0xf] %v866
    %882 = vst [vmem:[%s880] ss:$8 sm:$0xf0] %v866
    %s883 = scalar_lea.vmem %s3, 769
    %884 = vst [vmem:[%s883] ss:$8 sm:$0xf] %v867
    %885 = vst [vmem:[%s883] ss:$8 sm:$0xf0] %v867
    %s886 = scalar_lea.vmem %s3, 833
    %887 = vst [vmem:[%s886] ss:$8 sm:$0xf] %v868
    %888 = vst [vmem:[%s886] ss:$8 sm:$0xf0] %v868
    %s889 = scalar_lea.vmem %s3, 897
    %890 = vst [vmem:[%s889] ss:$8 sm:$0xf] %v869
    %891 = vst [vmem:[%s889] ss:$8 sm:$0xf0] %v869
    %s892 = scalar_lea.vmem %s3, 961
    %893 = vst [vmem:[%s892] ss:$8 sm:$0xf] %v870
    %894 = vst [vmem:[%s892] ss:$8 sm:$0xf0] %v870
    // Predicated region
    $region22: #{conv1x1_pad1_plus3.1} parent=1 // pred_check
      _
    $region23: #{conv1x1_pad1_plus3.1} parent=1 // pred_check_branch
      %896 = sbr.rel (0) target = $region25
    $region24: #{conv1x1_pad1_plus3.1} parent=1 // pred_region
      _
    $region25: #{conv1x1_pad1_plus3.1} parent=1 // pred_fallthru
      _
    // Predicated region
    $region26: #{conv1x1_pad1_plus3.1} parent=1 // pred_check
      _
    $region27: #{conv1x1_pad1_plus3.1} parent=1 // pred_check_branch
      %898 = sbr.rel (0) target = $region29
    $region28: #{conv1x1_pad1_plus3.1} parent=1 // pred_region
      _
    $region29: #{conv1x1_pad1_plus3.1} parent=1 // pred_fallthru
      _
    %899 = vsyncpa [#allocation3], 1
    %900 = vsyncpa [#allocation5], 1

</llo_original>
